<compile_context>
chip_gen: v7x
topology: tpu7x:2x2x1
jax: 0.10.0
libtpu: 0.0.40
codegen_flags: <defaults>
</compile_context>

<pallas_src>
import math

import jax
import jax.numpy as jnp
from jax.experimental import pallas as pl
from jax.experimental.pallas import tpu as pltpu


def _head_kernel(x_ref, w1_ref, b1_ref, w2_ref, b2_ref, o_ref):
    # x_ref:  [TM, H]      CLS-token features (bf16)
    # w1_ref: [H, H]       dense weight, [in, out] (bf16)
    # b1_ref: [1, H]       dense bias (f32)
    # w2_ref: [H, C_pad]   out_proj weight, [in, out], zero-padded (bf16)
    # b2_ref: [1, C_pad]   out_proj bias, zero-padded (f32)
    # o_ref:  [TM, C_pad]  logits (padded)
    x = x_ref[...]

    # dense: x @ W1 (bf16 operands, f32 accumulate on the MXU) + b1 in f32
    h = jnp.dot(x, w1_ref[...], preferred_element_type=jnp.float32)
    h = h + b1_ref[...]

    # exact (erf-based) GELU in f32, matching torch.nn.functional.gelu default
    h = 0.5 * h * (1.0 + jax.lax.erf(h * (1.0 / math.sqrt(2.0))))

    # out_proj: h @ W2 (bf16 operands, f32 accumulate) + b2
    out = jnp.dot(h.astype(w2_ref.dtype), w2_ref[...],
                  preferred_element_type=jnp.float32)
    out = out + b2_ref[...]
    o_ref[...] = out.astype(o_ref.dtype)


def electra_classification_head(features, w1, b1, w2, b2, *, block_b=256):
    """features: [B, S, H] float32. w1: [H, H], b1: [H], w2: [H, C], b2: [C]
    (weights pre-transposed to [in, out]). Returns logits [B, C] float32."""
    B, S, H = features.shape
    C = w2.shape[1]
    c_pad = ((C + 127) // 128) * 128          # lane-dense output width

    # Glue: CLS-token slice (dropout is identity in eval mode).
    x = features[:, 0, :].astype(jnp.bfloat16)              # [B, H]
    w1_bf = w1.astype(jnp.bfloat16)                          # [H, H]
    w2_pad = jnp.zeros((H, c_pad), jnp.bfloat16).at[:, :C].set(
        w2.astype(jnp.bfloat16))                             # [H, C_pad]
    b1_2d = b1.reshape(1, H).astype(jnp.float32)             # [1, H]
    b2_pad = jnp.zeros((1, c_pad), jnp.float32).at[:, :C].set(
        b2.astype(jnp.float32))                              # [1, C_pad]

    # Batch tile: 256 fills the v6e/v7x 256-wide MXU (and is a 128-multiple
    # for v5e); clamp to B so tiny batches use a single full-extent block.
    tm = min(block_b, B)
    grid = (pl.cdiv(B, tm),)

    out_padded = pl.pallas_call(
        _head_kernel,
        out_shape=jax.ShapeDtypeStruct((B, c_pad), features.dtype),
        grid=grid,
        in_specs=[
            pl.BlockSpec((tm, H), lambda i: (i, 0)),       # x: tiled over batch
            pl.BlockSpec((H, H), lambda i: (0, 0)),        # W1: resident
            pl.BlockSpec((1, H), lambda i: (0, 0)),        # b1: resident
            pl.BlockSpec((H, c_pad), lambda i: (0, 0)),    # W2: resident
            pl.BlockSpec((1, c_pad), lambda i: (0, 0)),    # b2: resident
        ],
        out_specs=pl.BlockSpec((tm, c_pad), lambda i: (i, 0)),
        compiler_params=pltpu.CompilerParams(
            dimension_semantics=("parallel",),
        ),
    )(x, w1_bf, b1_2d, w2_pad, b2_pad)

    return out_padded[:, :C]


def _reference(features, w1, b1, w2, b2):
    x = features[:, 0, :]
    h = x @ w1 + b1
    h = 0.5 * h * (1.0 + jax.lax.erf(h / math.sqrt(2.0)))
    return h @ w2 + b2


if __name__ == "__main__":
    # Small config: batch=2, seq=8, hidden=32, classes=4
    B, S, H, C = 2, 8, 32, 4

    key = jax.random.PRNGKey(0)
    k_feat, k_w1, k_b1, k_w2, k_b2 = jax.random.split(key, 5)

    features = jax.random.normal(k_feat, (B, S, H), dtype=jnp.float32)

    # Deterministic parameter init (PyTorch nn.Linear uses weight [out, in];
    # we store weights pre-transposed as [in, out] for y = x @ W + b).
    bound1 = 1.0 / math.sqrt(H)
    w1 = jax.random.uniform(k_w1, (H, H), jnp.float32, -bound1, bound1)
    b1 = jax.random.uniform(k_b1, (H,), jnp.float32, -bound1, bound1)
    bound2 = 1.0 / math.sqrt(H)
    w2 = jax.random.uniform(k_w2, (H, C), jnp.float32, -bound2, bound2)
    b2 = jax.random.uniform(k_b2, (C,), jnp.float32, -bound2, bound2)

    logits = electra_classification_head(features, w1, b1, w2, b2)
    logits = jax.block_until_ready(logits)

    ref = _reference(features, w1, b1, w2, b2)
    assert logits.shape == (B, C)
    # Tolerance loosened vs. the pure-f32 version: matmul operands are bf16
    # (f32 accumulation), so expect ~1e-2-scale absolute deviations.
    assert jnp.allclose(logits, ref, atol=5e-2, rtol=5e-2), "mismatch vs reference"

    print("KERNEL_OK")
</pallas_src>

<mosaic_0001>
module attributes {stable_mosaic.version = 11 : i64} {
  func.func @_head_kernel(%arg0: i32, %arg1: memref<2x32xbf16, #tpu.memory_space<vmem>>, %arg2: memref<32x32xbf16, #tpu.memory_space<vmem>>, %arg3: memref<1x32xf32, #tpu.memory_space<vmem>>, %arg4: memref<32x128xbf16, #tpu.memory_space<vmem>>, %arg5: memref<1x128xf32, #tpu.memory_space<vmem>>, %arg6: memref<2x128xf32, #tpu.memory_space<vmem>>) attributes {dimension_semantics = [#tpu.dimension_semantics<parallel>], iteration_bounds = array<i64: 1>, scalar_prefetch = 0 : i64, scratch_operands = 0 : i64, tpu.core_type = #tpu.core_type<tc>, window_params = [{transform_indices = @transform_0, window_bounds = array<i64: 2, 32>}, {pipeline_mode = #tpu.pipeline_mode<synchronous>, transform_indices = @transform_1, window_bounds = array<i64: 32, 32>}, {pipeline_mode = #tpu.pipeline_mode<synchronous>, transform_indices = @transform_2, window_bounds = array<i64: 1, 32>}, {pipeline_mode = #tpu.pipeline_mode<synchronous>, transform_indices = @transform_3, window_bounds = array<i64: 32, 128>}, {pipeline_mode = #tpu.pipeline_mode<synchronous>, transform_indices = @transform_4, window_bounds = array<i64: 1, 128>}, {transform_indices = @transform_5, window_bounds = array<i64: 2, 128>}]} {
    %c0 = arith.constant 0 : index
    %c0_0 = arith.constant 0 : index
    %0 = vector.load %arg1[%c0, %c0_0] : memref<2x32xbf16, #tpu.memory_space<vmem>>, vector<2x32xbf16>
    %c0_1 = arith.constant 0 : index
    %c0_2 = arith.constant 0 : index
    %1 = vector.load %arg2[%c0_1, %c0_2] : memref<32x32xbf16, #tpu.memory_space<vmem>>, vector<32x32xbf16>
    %cst = arith.constant dense<0.000000e+00> : vector<2x32xf32>
    %2 = tpu.matmul %0, %1, %cst {dimension_numbers = #tpu.dot_dimension_numbers<[1], [0], [0], [1], [0, 0, 1, 1], [], []>} : vector<2x32xbf16>, vector<32x32xbf16>, vector<2x32xf32> -> vector<2x32xf32>
    %c0_3 = arith.constant 0 : index
    %c0_4 = arith.constant 0 : index
    %3 = vector.load %arg3[%c0_3, %c0_4] : memref<1x32xf32, #tpu.memory_space<vmem>>, vector<1x32xf32>
    %4 = vector.broadcast %3 : vector<1x32xf32> to vector<2x32xf32>
    %5 = arith.addf %2, %4 : vector<2x32xf32>
    %cst_5 = arith.constant 5.000000e-01 : f32
    %6 = vector.broadcast %cst_5 : f32 to vector<2x32xf32>
    %7 = arith.mulf %6, %5 : vector<2x32xf32>
    %cst_6 = arith.constant 0.707106769 : f32
    %8 = vector.broadcast %cst_6 : f32 to vector<2x32xf32>
    %9 = arith.mulf %5, %8 : vector<2x32xf32>
    %10 = math.erf %9 : vector<2x32xf32>
    %cst_7 = arith.constant 1.000000e+00 : f32
    %11 = vector.broadcast %cst_7 : f32 to vector<2x32xf32>
    %12 = arith.addf %11, %10 : vector<2x32xf32>
    %13 = arith.mulf %7, %12 : vector<2x32xf32>
    %14 = arith.truncf %13 : vector<2x32xf32> to vector<2x32xbf16>
    %c0_8 = arith.constant 0 : index
    %c0_9 = arith.constant 0 : index
    %15 = vector.load %arg4[%c0_8, %c0_9] : memref<32x128xbf16, #tpu.memory_space<vmem>>, vector<32x128xbf16>
    %cst_10 = arith.constant dense<0.000000e+00> : vector<2x128xf32>
    %16 = tpu.matmul %14, %15, %cst_10 {dimension_numbers = #tpu.dot_dimension_numbers<[1], [0], [0], [1], [0, 0, 1, 1], [], []>} : vector<2x32xbf16>, vector<32x128xbf16>, vector<2x128xf32> -> vector<2x128xf32>
    %c0_11 = arith.constant 0 : index
    %c0_12 = arith.constant 0 : index
    %17 = vector.load %arg5[%c0_11, %c0_12] : memref<1x128xf32, #tpu.memory_space<vmem>>, vector<1x128xf32>
    %18 = vector.broadcast %17 : vector<1x128xf32> to vector<2x128xf32>
    %19 = arith.addf %16, %18 : vector<2x128xf32>
    %c0_13 = arith.constant 0 : index
    %c0_14 = arith.constant 0 : index
    %20 = vector.load %arg6[%c0_13, %c0_14] : memref<2x128xf32, #tpu.memory_space<vmem>>, vector<2x128xf32>
    tpu.vector_store %arg6[%c0_13, %c0_14], %19 {strides = array<i32>} : memref<2x128xf32, #tpu.memory_space<vmem>>, vector<2x128xf32>,
    return
  }
  func.func @transform_0(%arg0: i32) -> (i32, i32) {
    %c0_i32 = arith.constant 0 : i32
    %c0_i32_0 = arith.constant 0 : i32
    return %arg0, %c0_i32 : i32, i32
  }
  func.func @transform_1(%arg0: i32) -> (i32, i32) {
    %c0_i32 = arith.constant 0 : i32
    %c0_i32_0 = arith.constant 0 : i32
    %c0_i32_1 = arith.constant 0 : i32
    return %c0_i32, %c0_i32_0 : i32, i32
  }
  func.func @transform_2(%arg0: i32) -> (i32, i32) {
    %c0_i32 = arith.constant 0 : i32
    %c0_i32_0 = arith.constant 0 : i32
    %c0_i32_1 = arith.constant 0 : i32
    return %c0_i32, %c0_i32_0 : i32, i32
  }
  func.func @transform_3(%arg0: i32) -> (i32, i32) {
    %c0_i32 = arith.constant 0 : i32
    %c0_i32_0 = arith.constant 0 : i32
    %c0_i32_1 = arith.constant 0 : i32
    return %c0_i32, %c0_i32_0 : i32, i32
  }
  func.func @transform_4(%arg0: i32) -> (i32, i32) {
    %c0_i32 = arith.constant 0 : i32
    %c0_i32_0 = arith.constant 0 : i32
    %c0_i32_1 = arith.constant 0 : i32
    return %c0_i32, %c0_i32_0 : i32, i32
  }
  func.func @transform_5(%arg0: i32) -> (i32, i32) {
    %c0_i32 = arith.constant 0 : i32
    %c0_i32_0 = arith.constant 0 : i32
    return %arg0, %c0_i32 : i32, i32
  }
}

</mosaic_0001>

<llo_original>
// kernel: tpu_custom_call.1
$region0: #{tpu_custom_call.1}
  #allocation0 [shape = 'u32[]', space=smem, size = 0x4, offset = 0x4, fixed_abs, tag = 'smem constant byte address 0x4 - core index']
  #allocation1 [shape = 'u32[144,128]{1,0:T(1,128)}', space=vmem, size = 0x12000, scoped, tag = 'internal scratch']
  %s0 = inlined_call_operand.hbm [shape: bf16[2,32], index: 0, kind: input, shape index: {}]
  %s1 = inlined_call_operand.hbm [shape: bf16[32,32], index: 1, kind: input, shape index: {}]
  %s2 = inlined_call_operand.vmem [shape: f32[1,32], index: 2, kind: input, shape index: {}]
  %s3 = inlined_call_operand.hbm [shape: bf16[32,128], index: 3, kind: input, shape index: {}]
  %s4 = inlined_call_operand.vmem [shape: f32[1,128], index: 4, kind: input, shape index: {}]
  %s5 = inlined_call_operand.hbm [shape: f32[2,128], index: 5, kind: output, shape index: {}]
  %s6 = sld [smem:[#allocation0]]
  $region42: #{tpu_custom_call.1} parent=0
    _
  %s8 = ssub.s32 1, %s6
  %s9 = scalar_select 0, %s8, %s6
  $region1: #{tpu_custom_call.1} parent=0
    #allocation2 [shape = 'u8[512]{0}', space=vmem, size = 0x400, scoped, tag = 'input window, operand 0, single buffered']
    #allocation3 [shape = 's32[1]{0}', space=sflag, size = 0x4, scoped, tag = 'scoped memory for tpu_custom_call.1']
    #allocation4 [shape = 's32[1]{0}', space=sflag, size = 0x4, scoped, tag = 'scoped memory for tpu_custom_call.1']
    #allocation5 [shape = 'u8[8192]{0}', space=vmem, size = 0x2000, scoped, tag = 'input window, operand 1, single buffered']
    #allocation6 [shape = 's32[1]{0}', space=sflag, size = 0x4, scoped, tag = 'scoped memory for tpu_custom_call.1']
    #allocation7 [shape = 'u8[8192]{0}', space=vmem, size = 0x2000, scoped, tag = 'input window, operand 3, single buffered']
    #allocation8 [shape = 'u8[1024]{0}', space=vmem, size = 0x400, scoped, tag = 'output window, operand 0, single buffered']
    %10 = vsyncpa [#allocation3], 0
    %11 = vsyncpa [#allocation6], 0
    %12 = vsyncpa [#allocation4], 0
    // Predicated region
    $region2: #{tpu_custom_call.1} parent=1 // pred_check
      _
    $region3: #{tpu_custom_call.1} parent=1 // pred_check_branch
      %14 = sbr.rel (0) target = $region5
    $region4: #{tpu_custom_call.1} parent=1 // pred_region
      %s16 = ssub.s32 16, 16
      %17 = vsyncadd [#allocation3], %s16
      %s19 = sshll.u32 [#allocation2], 4
      %s20 = int_to_ptr.vmem [resolvable:$true] %s19
      %22 = dma.hbm_to_vmem [thread:$0]  %s0, 16, %s20, [#allocation3]
    $region5: #{tpu_custom_call.1} parent=1 // pred_fallthru
      _
    // Predicated region
    $region6: #{tpu_custom_call.1} parent=1 // pred_check
      _
    $region7: #{tpu_custom_call.1} parent=1 // pred_check_branch
      %24 = sbr.rel (0) target = $region9
    $region8: #{tpu_custom_call.1} parent=1 // pred_region
      %s26 = ssub.s32 256, 256
      %27 = vsyncadd [#allocation6], %s26
      %s28 = sshll.u32 [#allocation5], 4
      %s29 = int_to_ptr.vmem [resolvable:$true] %s28
      %34 = dma.hbm_to_vmem [thread:$0]  %s1, 256, %s29, [#allocation6], 64, 64, 4
    $region9: #{tpu_custom_call.1} parent=1 // pred_fallthru
      _
    // Predicated region
    $region10: #{tpu_custom_call.1} parent=1 // pred_check
      _
    $region11: #{tpu_custom_call.1} parent=1 // pred_check_branch
      %36 = sbr.rel (0) target = $region13
    $region12: #{tpu_custom_call.1} parent=1 // pred_region
      _
    $region13: #{tpu_custom_call.1} parent=1 // pred_fallthru
      _
    // Predicated region
    $region14: #{tpu_custom_call.1} parent=1 // pred_check
      _
    $region15: #{tpu_custom_call.1} parent=1 // pred_check_branch
      %38 = sbr.rel (0) target = $region17
    $region16: #{tpu_custom_call.1} parent=1 // pred_region
      %s40 = ssub.s32 256, 256
      %41 = vsyncadd [#allocation6], %s40
      %s42 = sshll.u32 [#allocation7], 4
      %s43 = int_to_ptr.vmem [resolvable:$true] %s42
      %48 = dma.hbm_to_vmem [thread:$0]  %s3, 256, %s43, [#allocation6], 64, 64, 4
    $region17: #{tpu_custom_call.1} parent=1 // pred_fallthru
      _
    // Predicated region
    $region18: #{tpu_custom_call.1} parent=1 // pred_check
      _
    $region19: #{tpu_custom_call.1} parent=1 // pred_check_branch
      %50 = sbr.rel (0) target = $region21
    $region20: #{tpu_custom_call.1} parent=1 // pred_region
      _
    $region21: #{tpu_custom_call.1} parent=1 // pred_fallthru
      _
    // Predicated region
    $region22: #{tpu_custom_call.1} parent=1 // pred_check
      _
    $region23: #{tpu_custom_call.1} parent=1 // pred_check_branch
      %52 = sbr.rel (0) target = $region25
    $region24: #{tpu_custom_call.1} parent=1 // pred_region
      %53 = dma.done [#allocation3], 16
    $region25: #{tpu_custom_call.1} parent=1 // pred_fallthru
      _
    // Predicated region
    $region26: #{tpu_custom_call.1} parent=1 // pred_check
      _
    $region27: #{tpu_custom_call.1} parent=1 // pred_check_branch
      %55 = sbr.rel (0) target = $region29
    $region28: #{tpu_custom_call.1} parent=1 // pred_region
      %56 = dma.done [#allocation6], 256
    $region29: #{tpu_custom_call.1} parent=1 // pred_fallthru
      _
    // Predicated region
    $region30: #{tpu_custom_call.1} parent=1 // pred_check
      _
    $region31: #{tpu_custom_call.1} parent=1 // pred_check_branch
      %58 = sbr.rel (0) target = $region33
    $region32: #{tpu_custom_call.1} parent=1 // pred_region
      %59 = dma.done [#allocation6], 256
    $region33: #{tpu_custom_call.1} parent=1 // pred_fallthru
      _
    %v61 = vld [vmem:[#allocation2] sm:$0x1]
    %v62 = vld [vmem:[#allocation5] sm:$0xf]
    %v63 = vld [vmem:[#allocation5 + $0x4] sm:$0xf]
    %v64 = vld [vmem:[#allocation5 + $0x8] sm:$0xf]
    %v65 = vld [vmem:[#allocation5 + $0xc] sm:$0xf]
    %v66 = vld [vmem:[%s2] sm:$0x1]
    %v68 = vlaneseq
    %v69 = vshrl.u32 %v68, 7
    %v70 = vsub.s32 0, %v69
    %v71 = vrot.slane %v66, %v70
    %v77 = vunpack.c.l.b16 %v62
    %v78 = vunpack.c.l.b16 %v63
    %v79 = vunpack.c.l.b16 %v64
    %v80 = vunpack.c.l.b16 %v65
    %v81 = vpack.c.b16 %v78, %v77
    %v82 = vpack.c.b16 %v80, %v79
    %vm85 = vcmask 261120
    %v87 = vsel %vm85, %v61, 0
    %89 = vmatprep.subr.bf16.mxu0 0
    %90 = vmatpush1.bf16.msra.mxu0 %v81
    %91 = vmatprep.subr.bf16.mxu0 0
    %92 = vmatpush1.bf16.msra.mxu0 %v82
    %93 = vmatprep.subr.bf16.mxu0 0
    %94 = vmatpush1.bf16.msra.mxu0 0
    %95 = vmatprep.subr.bf16.mxu0 0
    %96 = vmatpush1.bf16.msra.mxu0 0
    %97 = vmatprep.subr.bf16.mxu0 0
    %98 = vmatpush1.bf16.msra.mxu0 0
    %99 = vmatprep.subr.bf16.mxu0 0
    %100 = vmatpush1.bf16.msra.mxu0 0
    %101 = vmatprep.subr.bf16.mxu0 0
    %102 = vmatpush1.bf16.msra.mxu0 0
    %103 = vmatprep.subr.bf16.mxu0 0
    %104 = vmatpush1.bf16.msra.mxu0 0
    %105 = vmatprep.subr.bf16.mxu0 0
    %106 = vmatpush1.bf16.msra.mxu0 0
    %107 = vmatprep.subr.bf16.mxu0 0
    %108 = vmatpush1.bf16.msra.mxu0 0
    %109 = vmatprep.subr.bf16.mxu0 0
    %110 = vmatpush1.bf16.msra.mxu0 0
    %111 = vmatprep.subr.bf16.mxu0 0
    %112 = vmatpush1.bf16.msra.mxu0 0
    %113 = vmatprep.subr.bf16.mxu0 0
    %114 = vmatpush1.bf16.msra.mxu0 0
    %115 = vmatprep.subr.bf16.mxu0 0
    %116 = vmatpush1.bf16.msra.mxu0 0
    %117 = vmatprep.subr.bf16.mxu0 0
    %118 = vmatpush1.bf16.msra.mxu0 0
    %119 = vmatprep.subr.bf16.mxu0 0
    %120 = vmatpush1.bf16.msra.mxu0 0
    %121 = vmatprep.mubr.bf16.mxu0 0
    %122 = vmatmul.mubr.bf16.gmra.mrb[0].mxu0 %v87
    %v123 = vpop.f32.mrb[0].mxu0
    %v124 = vadd.f32 %v71, %v123
    %v125 = vpop.f32.mrb[0].mxu0
    %v126 = vpop.f32.mrb[0].mxu0
    %v127 = vpop.f32.mrb[0].mxu0
    %128 = vdwg.mxu0
    %v129 = vmul.f32 %v124, 0.5
    %v130 = vmul.f32 %v124, 0.70710677
    %v131 = verf.f32.pop %v130
    %v132 = vadd.f32 %v131, 1.0
    %v133 = vmul.f32 %v129, %v132
    %v134 = vpack.c.bf16 %v133, %v133
    %v135 = vld [vmem:[#allocation7] sm:$0xf]
    %v136 = vld [vmem:[#allocation7 + $0x4] sm:$0xf]
    %v137 = vld [vmem:[#allocation7 + $0x8] sm:$0xf]
    %v138 = vld [vmem:[#allocation7 + $0xc] sm:$0xf]
    %v139 = vld [vmem:[%s4] sm:$0x1]
    %v141 = vlaneseq
    %v142 = vshrl.u32 %v141, 7
    %v143 = vsub.s32 0, %v142
    %v144 = vrot.slane %v139, %v143
    %v150 = vunpack.c.l.b16 %v135
    %v151 = vunpack.c.l.b16 %v136
    %v152 = vunpack.c.l.b16 %v137
    %v153 = vunpack.c.l.b16 %v138
    %v154 = vpack.c.b16 %v151, %v150
    %v155 = vpack.c.b16 %v153, %v152
    %v159 = vsel %vm85, %v134, 0
    %161 = vmatprep.subr.bf16.mxu0 0
    %162 = vmatpush1.bf16.msra.mxu0 %v154
    %163 = vmatprep.subr.bf16.mxu0 0
    %164 = vmatpush1.bf16.msra.mxu0 %v155
    %165 = vmatprep.subr.bf16.mxu0 0
    %166 = vmatpush1.bf16.msra.mxu0 0
    %167 = vmatprep.subr.bf16.mxu0 0
    %168 = vmatpush1.bf16.msra.mxu0 0
    %169 = vmatprep.subr.bf16.mxu0 0
    %170 = vmatpush1.bf16.msra.mxu0 0
    %171 = vmatprep.subr.bf16.mxu0 0
    %172 = vmatpush1.bf16.msra.mxu0 0
    %173 = vmatprep.subr.bf16.mxu0 0
    %174 = vmatpush1.bf16.msra.mxu0 0
    %175 = vmatprep.subr.bf16.mxu0 0
    %176 = vmatpush1.bf16.msra.mxu0 0
    %177 = vmatprep.subr.bf16.mxu0 0
    %178 = vmatpush1.bf16.msra.mxu0 0
    %179 = vmatprep.subr.bf16.mxu0 0
    %180 = vmatpush1.bf16.msra.mxu0 0
    %181 = vmatprep.subr.bf16.mxu0 0
    %182 = vmatpush1.bf16.msra.mxu0 0
    %183 = vmatprep.subr.bf16.mxu0 0
    %184 = vmatpush1.bf16.msra.mxu0 0
    %185 = vmatprep.subr.bf16.mxu0 0
    %186 = vmatpush1.bf16.msra.mxu0 0
    %187 = vmatprep.subr.bf16.mxu0 0
    %188 = vmatpush1.bf16.msra.mxu0 0
    %189 = vmatprep.subr.bf16.mxu0 0
    %190 = vmatpush1.bf16.msra.mxu0 0
    %191 = vmatprep.subr.bf16.mxu0 0
    %192 = vmatpush1.bf16.msra.mxu0 0
    %193 = vmatprep.mubr.bf16.mxu0 0
    %194 = vmatmul.mubr.bf16.gmra.mrb[0].mxu0 %v159
    %v195 = vpop.f32.mrb[0].mxu0
    %v196 = vadd.f32 %v144, %v195
    %v197 = vpop.f32.mrb[0].mxu0
    %v198 = vpop.f32.mrb[0].mxu0
    %v199 = vpop.f32.mrb[0].mxu0
    %200 = vdwg.mxu0
    %201 = vst [vmem:[#allocation8] sm:$0x3] %v196
    // Predicated region
    $region34: #{tpu_custom_call.1} parent=1 // pred_check
      _
    $region35: #{tpu_custom_call.1} parent=1 // pred_check_branch
      %203 = sbr.rel (0) target = $region37
    $region36: #{tpu_custom_call.1} parent=1 // pred_region
      %s205 = ssub.s32 32, 32
      %206 = vsyncadd [#allocation4], %s205
      %s208 = sshll.u32 [#allocation8], 4
      %s209 = int_to_ptr.vmem [resolvable:$true] %s208
      %211 = dma.vmem_to_hbm [thread:$0]  %s209, 32, %s5, [#allocation4]
    $region37: #{tpu_custom_call.1} parent=1 // pred_fallthru
      _
    // Predicated region
    $region38: #{tpu_custom_call.1} parent=1 // pred_check
      _
    $region39: #{tpu_custom_call.1} parent=1 // pred_check_branch
      %213 = sbr.rel (0) target = $region41
    $region40: #{tpu_custom_call.1} parent=1 // pred_region
      %214 = dma.done [#allocation4], 32
    $region41: #{tpu_custom_call.1} parent=1 // pred_fallthru
      _
    %215 = vsyncpa [#allocation3], 1
    %216 = vsyncpa [#allocation6], 1
    %217 = vsyncpa [#allocation4], 1

</llo_original>
